<compile_context>
chip_gen: v7x
topology: tpu7x:2x2x1
jax: 0.10.0
libtpu: 0.0.40
codegen_flags: <defaults>
</compile_context>

<pallas_src>
import jax
import jax.numpy as jnp
from jax.experimental import pallas as pl
from jax.experimental.pallas import tpu as pltpu


LANE = 128   # lane width: feature axes are zero-padded to a multiple of this


def _round_up(v, m):
    return (v + m - 1) // m * m


def _pick_tiles(n):
    """Adaptive (row tile, S-column tile, padded node count).

    Bigger tiles amortize the ~0.35 us per-grid-step overhead; TILE_M is kept
    modest so medium graphs still expose >= 2 "parallel" row tiles (v7x 2 TCs).
    """
    n_pad = _round_up(max(n, 128), 128)

    def largest(cap):
        t = min(cap, n_pad)
        t -= t % 128
        while n_pad % t:
            t -= 128
        return t

    tk = largest(512)   # reduction (S-column) tile: grow this first
    tm = largest(256)   # node-row tile
    if n_pad >= 256 and n_pad // tm < 2:
        tm = 128        # guarantee >= 2 parallel row tiles when possible
    return tm, tk, n_pad


# ----------------------------- stage 1: lin0 + ReLU -------------------------

def lin0_relu_kernel(x_ref, w0t_ref, b0_ref, h_ref):
    h = jnp.dot(x_ref[...], w0t_ref[...], preferred_element_type=jnp.float32)
    h_ref[...] = jnp.maximum(h + b0_ref[...], 0.0).astype(h_ref.dtype)


# ------------------- stage 2: ChebConv(K=2) + ReLU + add-pool ---------------

def cheb_pool_kernel(h_col_ref, h_row_ref, s_ref, wc0t_ref, wc1t_ref, bc_ref,
                     p_ref, feat_ref, pooled_ref, acc_ref):
    k = pl.program_id(1)

    @pl.when(k == 0)
    def _init():
        acc_ref[...] = jnp.zeros_like(acc_ref)

    # Accumulate (S @ H) for this row tile over the S-column reduction axis.
    acc_ref[...] += jnp.dot(s_ref[...], h_col_ref[...],
                            preferred_element_type=jnp.float32)

    @pl.when(k == pl.num_programs(1) - 1)
    def _finalize():
        # ChebConv K=2 'sym' (lambda_max=2): out = H@W0^T - (S@H)@W1^T + b; ReLU.
        out = jnp.dot(h_row_ref[...], wc0t_ref[...],
                      preferred_element_type=jnp.float32)
        out = out - jnp.dot(acc_ref[...], wc1t_ref[...],          # f32 x f32
                            preferred_element_type=jnp.float32)
        out = jnp.maximum(out + bc_ref[...], 0.0)                  # [tm, dimp] f32
        feat_ref[...] = out.astype(feat_ref.dtype)                 # bf16 writeback
        # Partial global_add_pool for this row tile (summed over tiles outside).
        pooled_ref[...] = jnp.dot(p_ref[...], out.astype(jnp.bfloat16),
                                  preferred_element_type=jnp.float32)[None]


def java_encoder(x, edge_index, batch, params, num_graphs):
    """Glue (dense S / P build, padding, casts) + the two Pallas calls."""
    n, f = x.shape
    dim = params["w0"].shape[0]

    tile_m, tile_k, n_pad = _pick_tiles(n)
    dim_pad = _round_up(dim, LANE)
    f_pad = _round_up(f, LANE)
    g_pad = _round_up(max(num_graphs, 1), 8)
    grid_i = n_pad // tile_m          # node-row tiles      ("parallel")
    grid_k = n_pad // tile_k          # S-column tiles      ("arbitrary" reduction)

    # --- dense sym-normalized adjacency S and one-hot pooling matrix P ------
    # Padded nodes have degree 0 -> their S rows/cols stay exactly zero.
    # TODO(synk): for very large graphs replace this dense O(N^2) build with a
    # scalar-prefetched block-sparse scheme and skip all-zero S tiles.
    row, col = edge_index[0], edge_index[1]
    a = jnp.zeros((n_pad, n_pad), jnp.float32).at[row, col].add(1.0)
    deg = jnp.zeros((n_pad,), jnp.float32).at[row].add(1.0)
    dinv = jnp.where(deg > 0, 1.0 / jnp.sqrt(deg), 0.0)
    s = (dinv[:, None] * a * dinv[None, :]).astype(jnp.bfloat16)   # [Np, Np]

    # One-hot pooling matrix; padded nodes get graph id -1 -> all-zero columns.
    batch_pad = jnp.full((n_pad,), -1, jnp.int32).at[:n].set(batch.astype(jnp.int32))
    p = (batch_pad[None, :] == jnp.arange(g_pad, dtype=jnp.int32)[:, None]
         ).astype(jnp.bfloat16)                                    # [Gp, Np]

    # --- padded inputs / weights ---------------------------------------------
    x_p = jnp.zeros((n_pad, f_pad), jnp.bfloat16).at[:n, :f].set(
        x.astype(jnp.bfloat16))
    w0t = jnp.zeros((f_pad, dim_pad), jnp.bfloat16).at[:f, :dim].set(
        params["w0"].T.astype(jnp.bfloat16))
    b0 = jnp.zeros((1, dim_pad), jnp.float32).at[0, :dim].set(params["b0"])
    wc0t = jnp.zeros((dim_pad, dim_pad), jnp.bfloat16).at[:dim, :dim].set(
        params["wc0"].T.astype(jnp.bfloat16))
    wc1t = jnp.zeros((dim_pad, dim_pad), jnp.float32).at[:dim, :dim].set(
        params["wc1"].T)                                           # f32 (precision)
    bc = jnp.zeros((1, dim_pad), jnp.float32).at[0, :dim].set(params["bc"])

    # --- stage 1: H = ReLU(X @ W0^T + b0), computed once, stored bf16 --------
    h = pl.pallas_call(
        lin0_relu_kernel,
        out_shape=jax.ShapeDtypeStruct((n_pad, dim_pad), jnp.bfloat16),
        grid_spec=pltpu.PrefetchScalarGridSpec(
            num_scalar_prefetch=0,
            grid=(grid_i,),
            in_specs=[
                pl.BlockSpec((tile_m, f_pad), lambda i: (i, 0)),     # x row tile
                pl.BlockSpec((f_pad, dim_pad), lambda i: (0, 0)),    # W0^T (resident)
                pl.BlockSpec((1, dim_pad), lambda i: (0, 0)),        # b0
            ],
            out_specs=pl.BlockSpec((tile_m, dim_pad), lambda i: (i, 0)),
        ),
        compiler_params=pltpu.CompilerParams(
            dimension_semantics=("parallel",)),
        cost_estimate=pl.CostEstimate(
            flops=int(2 * n_pad * f_pad * dim_pad), transcendentals=0,
            bytes_accessed=int(n_pad * (f_pad + dim_pad) * 2
                               + f_pad * dim_pad * 2 + dim_pad * 4)),
    )(x_p, w0t, b0)

    # --- stage 2: ChebConv + ReLU + pooling -----------------------------------
    flops = (2 * n_pad * n_pad * dim_pad          # S @ H
             + 4 * n_pad * dim_pad * dim_pad      # two Cheb matmuls
             + 2 * g_pad * n_pad * dim_pad)       # pooling
    bytes_accessed = (n_pad * n_pad * 2                       # S (bf16, dominant)
                      + (grid_i + 1) * n_pad * dim_pad * 2    # H column + row streams
                      + g_pad * n_pad * 2                     # P
                      + dim_pad * dim_pad * (2 + 4)           # Wc0^T / Wc1^T
                      + 2 * dim_pad * 4                       # bc
                      + n_pad * dim_pad * 2                   # feat (bf16)
                      + grid_i * g_pad * dim_pad * 4)         # pooled partials

    vmem_bytes = (2 * tile_m * tile_k * 2          # S tile (bf16) double-buffered
                  + 2 * tile_k * dim_pad * 2       # H column tiles (bf16)
                  + 2 * tile_m * dim_pad * 2       # H row tile (bf16)
                  + 2 * dim_pad * dim_pad * 2      # Wc0^T (bf16)
                  + 2 * dim_pad * dim_pad * 4      # Wc1^T (f32)
                  + 2 * dim_pad * 4                # bc
                  + 2 * g_pad * tile_m * 2         # P tile
                  + tile_m * dim_pad * 4           # acc scratch (f32)
                  + 2 * tile_m * dim_pad * 2       # feat out block (bf16)
                  + 2 * g_pad * dim_pad * 4)       # pooled partial block
    vmem_limit = int(min(max(2 * vmem_bytes + (4 << 20), 16 << 20), 64 << 20))

    grid_spec = pltpu.PrefetchScalarGridSpec(
        num_scalar_prefetch=0,
        grid=(grid_i, grid_k),
        in_specs=[
            pl.BlockSpec((tile_k, dim_pad), lambda i, k: (k, 0)),    # H column tile (streamed)
            pl.BlockSpec((tile_m, dim_pad), lambda i, k: (i, 0)),    # H row tile (resident over k)
            pl.BlockSpec((tile_m, tile_k), lambda i, k: (i, k)),     # S tile (streamed)
            pl.BlockSpec((dim_pad, dim_pad), lambda i, k: (0, 0)),   # Wc0^T (resident)
            pl.BlockSpec((dim_pad, dim_pad), lambda i, k: (0, 0)),   # Wc1^T (resident, f32)
            pl.BlockSpec((1, dim_pad), lambda i, k: (0, 0)),         # bc
            pl.BlockSpec((g_pad, tile_m), lambda i, k: (0, i)),      # P tile
        ],
        out_specs=(
            pl.BlockSpec((tile_m, dim_pad), lambda i, k: (i, 0)),            # feat (bf16)
            pl.BlockSpec((1, g_pad, dim_pad), lambda i, k: (i, 0, 0)),       # pooled partials
        ),
        scratch_shapes=[pltpu.VMEM((tile_m, dim_pad), jnp.float32)],          # S@H accumulator
    )

    feat_pad, pooled_partial = pl.pallas_call(
        cheb_pool_kernel,
        out_shape=(
            jax.ShapeDtypeStruct((n_pad, dim_pad), jnp.bfloat16),
            jax.ShapeDtypeStruct((grid_i, g_pad, dim_pad), jnp.float32),
        ),
        grid_spec=grid_spec,
        compiler_params=pltpu.CompilerParams(
            dimension_semantics=("parallel", "arbitrary"),
            vmem_limit_bytes=vmem_limit),
        cost_estimate=pl.CostEstimate(flops=int(flops), transcendentals=0,
                                      bytes_accessed=int(bytes_accessed)),
    )(h, h, s, wc0t, wc1t, bc, p)

    pooled = pooled_partial.sum(axis=0)[:num_graphs, :dim]
    feat = feat_pad[:n, :dim].astype(jnp.float32)
    return pooled, feat


def init_params(key, num_features, dim):
    k0, k1, k2, k3, k4 = jax.random.split(key, 5)
    scale0 = 1.0 / jnp.sqrt(num_features)
    scalec = 1.0 / jnp.sqrt(dim)
    return {
        "w0": jax.random.uniform(k0, (dim, num_features), jnp.float32, -scale0, scale0),
        "b0": jax.random.uniform(k1, (dim,), jnp.float32, -scale0, scale0),
        "wc0": jax.random.uniform(k2, (dim, dim), jnp.float32, -scalec, scalec),
        "wc1": jax.random.uniform(k3, (dim, dim), jnp.float32, -scalec, scalec),
        "bc": jax.random.uniform(k4, (dim,), jnp.float32, -scalec, scalec),
    }


def _reference(x, edge_index, batch, params, num_graphs):
    """Pure f32 JAX reference of the PyTorch forward."""
    n = x.shape[0]
    h = jax.nn.relu(x @ params["w0"].T + params["b0"])
    row, col = edge_index[0], edge_index[1]
    a = jnp.zeros((n, n), jnp.float32).at[row, col].add(1.0)
    deg = jnp.zeros((n,), jnp.float32).at[row].add(1.0)
    dinv = jnp.where(deg > 0, 1.0 / jnp.sqrt(deg), 0.0)
    s = dinv[:, None] * a * dinv[None, :]
    out = jax.nn.relu(h @ params["wc0"].T - (s @ h) @ params["wc1"].T + params["bc"])
    pooled = jax.ops.segment_sum(out, batch, num_graphs)
    return pooled, out


if __name__ == "__main__":
    key = jax.random.PRNGKey(0)
    num_features, dim = 8, 32
    n_nodes, num_graphs = 16, 2           # two graphs of 8 nodes each

    kx, kp = jax.random.split(key)
    x = jax.random.normal(kx, (n_nodes, num_features), jnp.float32)

    # Undirected ring within each graph of 8 nodes (both edge directions).
    src, dst = [], []
    for g in range(num_graphs):
        base = g * 8
        for i in range(8):
            a_i, b_i = base + i, base + (i + 1) % 8
            src += [a_i, b_i]
            dst += [b_i, a_i]
    edge_index = jnp.array([src, dst], dtype=jnp.int32)
    batch = jnp.repeat(jnp.arange(num_graphs, dtype=jnp.int32), 8)

    params = init_params(kp, num_features, dim)

    pooled, feat = java_encoder(x, edge_index, batch, params, num_graphs)
    jax.block_until_ready((pooled, feat))
    assert pooled.shape == (num_graphs, dim) and feat.shape == (n_nodes, dim)

    pooled_ref, feat_ref = _reference(x, edge_index, batch, params, num_graphs)
    assert jnp.allclose(feat, feat_ref, rtol=1e-1, atol=1e-1), "feat mismatch"
    assert jnp.allclose(pooled, pooled_ref, rtol=1e-1, atol=3e-1), "pooled mismatch"
    print("KERNEL_OK")
</pallas_src>

<mosaic_0001>
module attributes {stable_mosaic.version = 11 : i64} {
  func.func @lin0_relu_kernel(%arg0: i32, %arg1: memref<128x128xbf16, #tpu.memory_space<vmem>>, %arg2: memref<128x128xbf16, #tpu.memory_space<vmem>>, %arg3: memref<1x128xf32, #tpu.memory_space<vmem>>, %arg4: memref<128x128xbf16, #tpu.memory_space<vmem>>) attributes {dimension_semantics = [#tpu.dimension_semantics<parallel>], iteration_bounds = array<i64: 1>, scalar_prefetch = 0 : i64, scratch_operands = 0 : i64, tpu.core_type = #tpu.core_type<tc>, window_params = [{transform_indices = @transform_0, window_bounds = array<i64: 128, 128>}, {pipeline_mode = #tpu.pipeline_mode<synchronous>, transform_indices = @transform_1, window_bounds = array<i64: 128, 128>}, {pipeline_mode = #tpu.pipeline_mode<synchronous>, transform_indices = @transform_2, window_bounds = array<i64: 1, 128>}, {transform_indices = @transform_3, window_bounds = array<i64: 128, 128>}]} {
    %c0 = arith.constant 0 : index
    %c0_0 = arith.constant 0 : index
    %0 = vector.load %arg1[%c0, %c0_0] : memref<128x128xbf16, #tpu.memory_space<vmem>>, vector<128x128xbf16>
    %c0_1 = arith.constant 0 : index
    %c0_2 = arith.constant 0 : index
    %1 = vector.load %arg2[%c0_1, %c0_2] : memref<128x128xbf16, #tpu.memory_space<vmem>>, vector<128x128xbf16>
    %cst = arith.constant dense<0.000000e+00> : vector<128x128xf32>
    %2 = tpu.matmul %0, %1, %cst {dimension_numbers = #tpu.dot_dimension_numbers<[1], [0], [0], [1], [0, 0, 1, 1], [], []>} : vector<128x128xbf16>, vector<128x128xbf16>, vector<128x128xf32> -> vector<128x128xf32>
    %c0_3 = arith.constant 0 : index
    %c0_4 = arith.constant 0 : index
    %3 = vector.load %arg3[%c0_3, %c0_4] : memref<1x128xf32, #tpu.memory_space<vmem>>, vector<1x128xf32>
    %4 = vector.broadcast %3 : vector<1x128xf32> to vector<128x128xf32>
    %5 = arith.addf %2, %4 : vector<128x128xf32>
    %cst_5 = arith.constant 0.000000e+00 : f32
    %6 = vector.broadcast %cst_5 : f32 to vector<128x128xf32>
    %7 = arith.maximumf %5, %6 : vector<128x128xf32>
    %8 = arith.truncf %7 : vector<128x128xf32> to vector<128x128xbf16>
    %c0_6 = arith.constant 0 : index
    %c0_7 = arith.constant 0 : index
    %9 = vector.load %arg4[%c0_6, %c0_7] : memref<128x128xbf16, #tpu.memory_space<vmem>>, vector<128x128xbf16>
    tpu.vector_store %arg4[%c0_6, %c0_7], %8 {strides = array<i32>} : memref<128x128xbf16, #tpu.memory_space<vmem>>, vector<128x128xbf16>,
    return
  }
  func.func @transform_0(%arg0: i32) -> (i32, i32) {
    %c0_i32 = arith.constant 0 : i32
    %c0_i32_0 = arith.constant 0 : i32
    return %arg0, %c0_i32 : i32, i32
  }
  func.func @transform_1(%arg0: i32) -> (i32, i32) {
    %c0_i32 = arith.constant 0 : i32
    %c0_i32_0 = arith.constant 0 : i32
    %c0_i32_1 = arith.constant 0 : i32
    return %c0_i32, %c0_i32_0 : i32, i32
  }
  func.func @transform_2(%arg0: i32) -> (i32, i32) {
    %c0_i32 = arith.constant 0 : i32
    %c0_i32_0 = arith.constant 0 : i32
    %c0_i32_1 = arith.constant 0 : i32
    return %c0_i32, %c0_i32_0 : i32, i32
  }
  func.func @transform_3(%arg0: i32) -> (i32, i32) {
    %c0_i32 = arith.constant 0 : i32
    %c0_i32_0 = arith.constant 0 : i32
    return %arg0, %c0_i32 : i32, i32
  }
}

</mosaic_0001>

<llo_original>
// kernel: tpu_custom_call.1
$region0: #{tpu_custom_call.1}
  #allocation0 [shape = 'u32[]', space=smem, size = 0x4, offset = 0x4, fixed_abs, tag = 'smem constant byte address 0x4 - core index']
  #allocation1 [shape = 'u32[144,128]{1,0:T(1,128)}', space=vmem, size = 0x12000, scoped, tag = 'internal scratch']
  %s0 = inlined_call_operand.hbm [shape: bf16[128,128], index: 0, kind: input, shape index: {}]
  %s1 = inlined_call_operand.hbm [shape: bf16[128,128], index: 1, kind: input, shape index: {}]
  %s2 = inlined_call_operand.vmem [shape: f32[1,128], index: 2, kind: input, shape index: {}]
  %s3 = inlined_call_operand.hbm [shape: bf16[128,128], index: 3, kind: output, shape index: {}]
  %s4 = sld [smem:[#allocation0]]
  $region30: #{tpu_custom_call.1} parent=0
    _
  %s6 = ssub.s32 1, %s4
  %s7 = scalar_select 0, %s6, %s4
  $region1: #{tpu_custom_call.1} parent=0
    #allocation2 [shape = 'u8[32768]{0}', space=vmem, size = 0x8000, scoped, tag = 'input window, operand 0, single buffered']
    #allocation3 [shape = 's32[1]{0}', space=sflag, size = 0x4, scoped, tag = 'scoped memory for tpu_custom_call.1']
    #allocation4 [shape = 's32[1]{0}', space=sflag, size = 0x4, scoped, tag = 'scoped memory for tpu_custom_call.1']
    #allocation5 [shape = 'u8[32768]{0}', space=vmem, size = 0x8000, scoped, tag = 'input window, operand 1, single buffered']
    #allocation6 [shape = 's32[1]{0}', space=sflag, size = 0x4, scoped, tag = 'scoped memory for tpu_custom_call.1']
    #allocation7 [shape = 'u8[32768]{0}', space=vmem, size = 0x8000, scoped, tag = 'output window, operand 0, single buffered']
    %8 = vsyncpa [#allocation3], 0
    %9 = vsyncpa [#allocation6], 0
    %10 = vsyncpa [#allocation4], 0
    // Predicated region
    $region2: #{tpu_custom_call.1} parent=1 // pred_check
      _
    $region3: #{tpu_custom_call.1} parent=1 // pred_check_branch
      %12 = sbr.rel (0) target = $region5
    $region4: #{tpu_custom_call.1} parent=1 // pred_region
      %s14 = ssub.s32 1024, 1024
      %15 = vsyncadd [#allocation3], %s14
      %s16 = sshll.u32 [#allocation2], 4
      %s17 = int_to_ptr.vmem [resolvable:$true] %s16
      %22 = dma.hbm_to_vmem [thread:$0]  %s0, 1024, %s17, [#allocation3], 64, 64, 4
    $region5: #{tpu_custom_call.1} parent=1 // pred_fallthru
      _
    // Predicated region
    $region6: #{tpu_custom_call.1} parent=1 // pred_check
      _
    $region7: #{tpu_custom_call.1} parent=1 // pred_check_branch
      %24 = sbr.rel (0) target = $region9
    $region8: #{tpu_custom_call.1} parent=1 // pred_region
      %s26 = ssub.s32 1024, 1024
      %27 = vsyncadd [#allocation6], %s26
      %s28 = sshll.u32 [#allocation5], 4
      %s29 = int_to_ptr.vmem [resolvable:$true] %s28
      %34 = dma.hbm_to_vmem [thread:$0]  %s1, 1024, %s29, [#allocation6], 64, 64, 4
    $region9: #{tpu_custom_call.1} parent=1 // pred_fallthru
      _
    // Predicated region
    $region10: #{tpu_custom_call.1} parent=1 // pred_check
      _
    $region11: #{tpu_custom_call.1} parent=1 // pred_check_branch
      %36 = sbr.rel (0) target = $region13
    $region12: #{tpu_custom_call.1} parent=1 // pred_region
      _
    $region13: #{tpu_custom_call.1} parent=1 // pred_fallthru
      _
    // Predicated region
    $region14: #{tpu_custom_call.1} parent=1 // pred_check
      _
    $region15: #{tpu_custom_call.1} parent=1 // pred_check_branch
      %38 = sbr.rel (0) target = $region17
    $region16: #{tpu_custom_call.1} parent=1 // pred_region
      %39 = dma.done [#allocation3], 1024
    $region17: #{tpu_custom_call.1} parent=1 // pred_fallthru
      _
    // Predicated region
    $region18: #{tpu_custom_call.1} parent=1 // pred_check
      _
    $region19: #{tpu_custom_call.1} parent=1 // pred_check_branch
      %41 = sbr.rel (0) target = $region21
    $region20: #{tpu_custom_call.1} parent=1 // pred_region
      %42 = dma.done [#allocation6], 1024
    $region21: #{tpu_custom_call.1} parent=1 // pred_fallthru
      _
    %v44 = vld [vmem:[#allocation2] sm:$0xf]
    %v45 = vld [vmem:[#allocation2 + $0x4] sm:$0xf]
    %v46 = vld [vmem:[#allocation2 + $0x8] sm:$0xf]
    %v47 = vld [vmem:[#allocation2 + $0xc] sm:$0xf]
    %v48 = vld [vmem:[#allocation2 + $0x10] sm:$0xf]
    %v49 = vld [vmem:[#allocation2 + $0x14] sm:$0xf]
    %v50 = vld [vmem:[#allocation2 + $0x18] sm:$0xf]
    %v51 = vld [vmem:[#allocation2 + $0x1c] sm:$0xf]
    %v52 = vld [vmem:[#allocation2 + $0x20] sm:$0xf]
    %v53 = vld [vmem:[#allocation2 + $0x24] sm:$0xf]
    %v54 = vld [vmem:[#allocation2 + $0x28] sm:$0xf]
    %v55 = vld [vmem:[#allocation2 + $0x2c] sm:$0xf]
    %v56 = vld [vmem:[#allocation2 + $0x30] sm:$0xf]
    %v57 = vld [vmem:[#allocation2 + $0x34] sm:$0xf]
    %v58 = vld [vmem:[#allocation2 + $0x38] sm:$0xf]
    %v59 = vld [vmem:[#allocation2 + $0x3c] sm:$0xf]
    %v60 = vld [vmem:[#allocation5] sm:$0xf]
    %v61 = vld [vmem:[#allocation5 + $0x4] sm:$0xf]
    %v62 = vld [vmem:[#allocation5 + $0x8] sm:$0xf]
    %v63 = vld [vmem:[#allocation5 + $0xc] sm:$0xf]
    %v64 = vld [vmem:[#allocation5 + $0x10] sm:$0xf]
    %v65 = vld [vmem:[#allocation5 + $0x14] sm:$0xf]
    %v66 = vld [vmem:[#allocation5 + $0x18] sm:$0xf]
    %v67 = vld [vmem:[#allocation5 + $0x1c] sm:$0xf]
    %v68 = vld [vmem:[#allocation5 + $0x20] sm:$0xf]
    %v69 = vld [vmem:[#allocation5 + $0x24] sm:$0xf]
    %v70 = vld [vmem:[#allocation5 + $0x28] sm:$0xf]
    %v71 = vld [vmem:[#allocation5 + $0x2c] sm:$0xf]
    %v72 = vld [vmem:[#allocation5 + $0x30] sm:$0xf]
    %v73 = vld [vmem:[#allocation5 + $0x34] sm:$0xf]
    %v74 = vld [vmem:[#allocation5 + $0x38] sm:$0xf]
    %v75 = vld [vmem:[#allocation5 + $0x3c] sm:$0xf]
    %v76 = vld [vmem:[%s2] sm:$0x1]
    %v78 = vlaneseq
    %v79 = vshrl.u32 %v78, 7
    %v80 = vsub.s32 0, %v79
    %v81 = vrot.slane %v76, %v80
    %v99 = vunpack.c.l.b16 %v44
    %v100 = vunpack.c.l.b16 %v45
    %v101 = vunpack.c.l.b16 %v46
    %v102 = vunpack.c.l.b16 %v47
    %v103 = vunpack.c.l.b16 %v48
    %v104 = vunpack.c.l.b16 %v49
    %v105 = vunpack.c.l.b16 %v50
    %v106 = vunpack.c.l.b16 %v51
    %v107 = vunpack.c.l.b16 %v52
    %v108 = vunpack.c.l.b16 %v53
    %v109 = vunpack.c.l.b16 %v54
    %v110 = vunpack.c.l.b16 %v55
    %v111 = vunpack.c.l.b16 %v56
    %v112 = vunpack.c.l.b16 %v57
    %v113 = vunpack.c.l.b16 %v58
    %v114 = vunpack.c.l.b16 %v59
    %v115 = vpack.c.b16 %v100, %v99
    %v116 = vpack.c.b16 %v102, %v101
    %v117 = vpack.c.b16 %v104, %v103
    %v118 = vpack.c.b16 %v106, %v105
    %v119 = vpack.c.b16 %v108, %v107
    %v120 = vpack.c.b16 %v110, %v109
    %v121 = vpack.c.b16 %v112, %v111
    %v122 = vpack.c.b16 %v114, %v113
    %v147 = vunpack.c.l.b16 %v60
    %v148 = vunpack.c.l.b16 %v61
    %v149 = vunpack.c.l.b16 %v62
    %v150 = vunpack.c.l.b16 %v63
    %v151 = vunpack.c.l.b16 %v64
    %v152 = vunpack.c.l.b16 %v65
    %v153 = vunpack.c.l.b16 %v66
    %v154 = vunpack.c.l.b16 %v67
    %v155 = vunpack.c.l.b16 %v68
    %v156 = vunpack.c.l.b16 %v69
    %v157 = vunpack.c.l.b16 %v70
    %v158 = vunpack.c.l.b16 %v71
    %v159 = vunpack.c.l.b16 %v72
    %v160 = vunpack.c.l.b16 %v73
    %v161 = vunpack.c.l.b16 %v74
    %v162 = vunpack.c.l.b16 %v75
    %v163 = vpack.c.b16 %v148, %v147
    %v164 = vpack.c.b16 %v150, %v149
    %v165 = vpack.c.b16 %v152, %v151
    %v166 = vpack.c.b16 %v154, %v153
    %v167 = vpack.c.b16 %v156, %v155
    %v168 = vpack.c.b16 %v158, %v157
    %v169 = vpack.c.b16 %v160, %v159
    %v170 = vpack.c.b16 %v162, %v161
    %179 = vmatprep.subr.bf16.mxu0 0
    %180 = vmatpush1.bf16.msra.mxu0 %v163
    %181 = vmatprep.subr.bf16.mxu0 0
    %182 = vmatpush1.bf16.msra.mxu0 %v164
    %183 = vmatprep.subr.bf16.mxu0 0
    %184 = vmatpush1.bf16.msra.mxu0 %v165
    %185 = vmatprep.subr.bf16.mxu0 0
    %186 = vmatpush1.bf16.msra.mxu0 %v166
    %187 = vmatprep.subr.bf16.mxu0 0
    %188 = vmatpush1.bf16.msra.mxu0 %v167
    %189 = vmatprep.subr.bf16.mxu0 0
    %190 = vmatpush1.bf16.msra.mxu0 %v168
    %191 = vmatprep.subr.bf16.mxu0 0
    %192 = vmatpush1.bf16.msra.mxu0 %v169
    %193 = vmatprep.subr.bf16.mxu0 0
    %194 = vmatpush1.bf16.msra.mxu0 %v170
    %195 = vmatprep.subr.bf16.mxu0 0
    %196 = vmatpush1.bf16.msra.mxu0 0
    %197 = vmatprep.subr.bf16.mxu0 0
    %198 = vmatpush1.bf16.msra.mxu0 0
    %199 = vmatprep.subr.bf16.mxu0 0
    %200 = vmatpush1.bf16.msra.mxu0 0
    %201 = vmatprep.subr.bf16.mxu0 0
    %202 = vmatpush1.bf16.msra.mxu0 0
    %203 = vmatprep.subr.bf16.mxu0 0
    %204 = vmatpush1.bf16.msra.mxu0 0
    %205 = vmatprep.subr.bf16.mxu0 0
    %206 = vmatpush1.bf16.msra.mxu0 0
    %207 = vmatprep.subr.bf16.mxu0 0
    %208 = vmatpush1.bf16.msra.mxu0 0
    %209 = vmatprep.subr.bf16.mxu0 0
    %210 = vmatpush1.bf16.msra.mxu0 0
    %211 = vmatprep.mubr.bf16.mxu0 0
    %212 = vmatmul.mubr.bf16.gmra.mrb[0].mxu0 %v115
    %v213 = vpop.f32.mrb[0].mxu0
    %v214 = vadd.f32 %v81, %v213
    %v215 = vpop.f32.mrb[0].mxu0
    %v216 = vpop.f32.mrb[0].mxu0
    %v217 = vadd.f32 %v81, %v216
    %v218 = vpop.f32.mrb[0].mxu0
    %219 = vmatprep.mubr.bf16.mxu0 0
    %220 = vmatmul.mubr.bf16.gmra.mrb[0].mxu0 %v116
    %v221 = vpop.f32.mrb[0].mxu0
    %v222 = vadd.f32 %v81, %v221
    %v223 = vpop.f32.mrb[0].mxu0
    %v224 = vpop.f32.mrb[0].mxu0
    %v225 = vadd.f32 %v81, %v224
    %v226 = vpop.f32.mrb[0].mxu0
    %227 = vmatprep.mubr.bf16.mxu0 0
    %228 = vmatmul.mubr.bf16.gmra.mrb[0].mxu0 %v117
    %v229 = vpop.f32.mrb[0].mxu0
    %v230 = vadd.f32 %v81, %v229
    %v231 = vpop.f32.mrb[0].mxu0
    %v232 = vpop.f32.mrb[0].mxu0
    %v233 = vadd.f32 %v81, %v232
    %v234 = vpop.f32.mrb[0].mxu0
    %235 = vmatprep.mubr.bf16.mxu0 0
    %236 = vmatmul.mubr.bf16.gmra.mrb[0].mxu0 %v118
    %v237 = vpop.f32.mrb[0].mxu0
    %v238 = vadd.f32 %v81, %v237
    %v239 = vpop.f32.mrb[0].mxu0
    %v240 = vpop.f32.mrb[0].mxu0
    %v241 = vadd.f32 %v81, %v240
    %v242 = vpop.f32.mrb[0].mxu0
    %243 = vmatprep.mubr.bf16.mxu0 0
    %244 = vmatmul.mubr.bf16.gmra.mrb[0].mxu0 %v119
    %v245 = vpop.f32.mrb[0].mxu0
    %v246 = vadd.f32 %v81, %v245
    %v247 = vpop.f32.mrb[0].mxu0
    %v248 = vpop.f32.mrb[0].mxu0
    %v249 = vadd.f32 %v81, %v248
    %v250 = vpop.f32.mrb[0].mxu0
    %251 = vmatprep.mubr.bf16.mxu0 0
    %252 = vmatmul.mubr.bf16.gmra.mrb[0].mxu0 %v120
    %v253 = vpop.f32.mrb[0].mxu0
    %v254 = vadd.f32 %v81, %v253
    %v255 = vpop.f32.mrb[0].mxu0
    %v256 = vpop.f32.mrb[0].mxu0
    %v257 = vadd.f32 %v81, %v256
    %v258 = vpop.f32.mrb[0].mxu0
    %259 = vmatprep.mubr.bf16.mxu0 0
    %260 = vmatmul.mubr.bf16.gmra.mrb[0].mxu0 %v121
    %v261 = vpop.f32.mrb[0].mxu0
    %v262 = vadd.f32 %v81, %v261
    %v263 = vpop.f32.mrb[0].mxu0
    %v264 = vpop.f32.mrb[0].mxu0
    %v265 = vadd.f32 %v81, %v264
    %v266 = vpop.f32.mrb[0].mxu0
    %267 = vmatprep.mubr.bf16.mxu0 0
    %268 = vmatmul.mubr.bf16.gmra.mrb[0].mxu0 %v122
    %v269 = vpop.f32.mrb[0].mxu0
    %v270 = vadd.f32 %v81, %v269
    %v271 = vpop.f32.mrb[0].mxu0
    %v272 = vpop.f32.mrb[0].mxu0
    %v273 = vadd.f32 %v81, %v272
    %v274 = vpop.f32.mrb[0].mxu0
    %275 = vdwg.mxu0
    %v276 = vmax.f32 %v214, 0.0
    %v277 = vmax.f32 %v217, 0.0
    %v278 = vmax.f32 %v222, 0.0
    %v279 = vmax.f32 %v225, 0.0
    %v280 = vmax.f32 %v230, 0.0
    %v281 = vmax.f32 %v233, 0.0
    %v282 = vmax.f32 %v238, 0.0
    %v283 = vmax.f32 %v241, 0.0
    %v284 = vmax.f32 %v246, 0.0
    %v285 = vmax.f32 %v249, 0.0
    %v286 = vmax.f32 %v254, 0.0
    %v287 = vmax.f32 %v257, 0.0
    %v288 = vmax.f32 %v262, 0.0
    %v289 = vmax.f32 %v265, 0.0
    %v290 = vmax.f32 %v270, 0.0
    %v291 = vmax.f32 %v273, 0.0
    %v292 = vpack.c.bf16 %v277, %v276
    %v293 = vpack.c.bf16 %v279, %v278
    %v294 = vpack.c.bf16 %v281, %v280
    %v295 = vpack.c.bf16 %v283, %v282
    %v296 = vpack.c.bf16 %v285, %v284
    %v297 = vpack.c.bf16 %v287, %v286
    %v298 = vpack.c.bf16 %v289, %v288
    %v299 = vpack.c.bf16 %v291, %v290
    %v308 = vunpack.c.l.b16 %v292
    %v309 = vunpack.c.h.b16 %v292
    %v310 = vunpack.c.l.b16 %v293
    %v311 = vunpack.c.h.b16 %v293
    %v312 = vunpack.c.l.b16 %v294
    %v313 = vunpack.c.h.b16 %v294
    %v314 = vunpack.c.l.b16 %v295
    %v315 = vunpack.c.h.b16 %v295
    %v316 = vunpack.c.l.b16 %v296
    %v317 = vunpack.c.h.b16 %v296
    %v318 = vunpack.c.l.b16 %v297
    %v319 = vunpack.c.h.b16 %v297
    %v320 = vunpack.c.l.b16 %v298
    %v321 = vunpack.c.h.b16 %v298
    %v322 = vunpack.c.l.b16 %v299
    %v323 = vunpack.c.h.b16 %v299
    %v324 = vpack.c.b16 %v308, %v308
    %v325 = vpack.c.b16 %v309, %v309
    %v326 = vpack.c.b16 %v310, %v310
    %v327 = vpack.c.b16 %v311, %v311
    %v328 = vpack.c.b16 %v312, %v312
    %v329 = vpack.c.b16 %v313, %v313
    %v330 = vpack.c.b16 %v314, %v314
    %v331 = vpack.c.b16 %v315, %v315
    %v332 = vpack.c.b16 %v316, %v316
    %v333 = vpack.c.b16 %v317, %v317
    %v334 = vpack.c.b16 %v318, %v318
    %v335 = vpack.c.b16 %v319, %v319
    %v336 = vpack.c.b16 %v320, %v320
    %v337 = vpack.c.b16 %v321, %v321
    %v338 = vpack.c.b16 %v322, %v322
    %v339 = vpack.c.b16 %v323, %v323
    %356 = vst [vmem:[#allocation7] sm:$0xf] %v324
    %357 = vst [vmem:[#allocation7 + $0x4] sm:$0xf] %v325
    %358 = vst [vmem:[#allocation7 + $0x8] sm:$0xf] %v326
    %359 = vst [vmem:[#allocation7 + $0xc] sm:$0xf] %v327
    %360 = vst [vmem:[#allocation7 + $0x10] sm:$0xf] %v328
    %361 = vst [vmem:[#allocation7 + $0x14] sm:$0xf] %v329
    %362 = vst [vmem:[#allocation7 + $0x18] sm:$0xf] %v330
    %363 = vst [vmem:[#allocation7 + $0x1c] sm:$0xf] %v331
    %364 = vst [vmem:[#allocation7 + $0x20] sm:$0xf] %v332
    %365 = vst [vmem:[#allocation7 + $0x24] sm:$0xf] %v333
    %366 = vst [vmem:[#allocation7 + $0x28] sm:$0xf] %v334
    %367 = vst [vmem:[#allocation7 + $0x2c] sm:$0xf] %v335
    %368 = vst [vmem:[#allocation7 + $0x30] sm:$0xf] %v336
    %369 = vst [vmem:[#allocation7 + $0x34] sm:$0xf] %v337
    %370 = vst [vmem:[#allocation7 + $0x38] sm:$0xf] %v338
    %371 = vst [vmem:[#allocation7 + $0x3c] sm:$0xf] %v339
    // Predicated region
    $region22: #{tpu_custom_call.1} parent=1 // pred_check
      _
    $region23: #{tpu_custom_call.1} parent=1 // pred_check_branch
      %373 = sbr.rel (0) target = $region25
    $region24: #{tpu_custom_call.1} parent=1 // pred_region
      %s375 = ssub.s32 1024, 1024
      %376 = vsyncadd [#allocation4], %s375
      %s377 = sshll.u32 [#allocation7], 4
      %s378 = int_to_ptr.vmem [resolvable:$true] %s377
      %383 = dma.vmem_to_hbm [thread:$0]  %s378, 1024, %s3, [#allocation4], 64, 64, 4
    $region25: #{tpu_custom_call.1} parent=1 // pred_fallthru
      _
    // Predicated region
    $region26: #{tpu_custom_call.1} parent=1 // pred_check
      _
    $region27: #{tpu_custom_call.1} parent=1 // pred_check_branch
      %385 = sbr.rel (0) target = $region29
    $region28: #{tpu_custom_call.1} parent=1 // pred_region
      %386 = dma.done [#allocation4], 1024
    $region29: #{tpu_custom_call.1} parent=1 // pred_fallthru
      _
    %387 = vsyncpa [#allocation3], 1
    %388 = vsyncpa [#allocation6], 1
    %389 = vsyncpa [#allocation4], 1

</llo_original>
